<compile_context>
chip_gen: v5e
topology: v5e:2x2
jax: 0.10.0
libtpu: 0.0.40
codegen_flags: <defaults>
</compile_context>

<pallas_src>
import jax
import jax.numpy as jnp
from jax.experimental import pallas as pl
from jax.experimental.pallas import tpu as pltpu


def _round_up(x, m):
    return ((x + m - 1) // m) * m


def _npair_tile_kernel(x_ref, xt_ref, m_ref, pair_ref, row_acc):
    j = pl.program_id(1)
    nj = pl.num_programs(1)

    @pl.when(j == 0)
    def _init():
        row_acc[...] = jnp.zeros_like(row_acc)

    # bf16 x bf16 -> f32 accumulation on the MXU.
    s = jnp.dot(x_ref[...], xt_ref[...], preferred_element_type=jnp.float32)  # (TM, TN) f32

    # int8 {0,1} mask -> f32 once; padded rows/cols are all-zero so they contribute 0.
    contrib = m_ref[...].astype(jnp.float32) * jnp.abs(s - 1.0)               # (TM, TN)

    # Fold TN columns into 128 lanes with lane-aligned VPU adds; the cross-lane
    # reduction is deferred to the per-row-block finalize (keeps the XLU out of
    # the hot loop).
    tn = contrib.shape[1]
    acc = contrib[:, 0:128]
    for c in range(1, tn // 128):
        acc = acc + contrib[:, c * 128:(c + 1) * 128]
    row_acc[...] += acc

    @pl.when(j == nj - 1)
    def _finalize():
        pair_total = jnp.sum(row_acc[...])      # single lane+sublane reduce per row block
        pair_ref[...] = jnp.full(pair_ref.shape, pair_total, dtype=jnp.float32)


def _pick_tiles(n, d):
    # Lane (N) tile: multiple of 256 to keep the 256x256 MXU fed (128-multiples
    # already satisfy v5e's 4x128^2); sublane (M) tile: multiple of 8 (256/512 for
    # big N). Shrink if the double-buffered footprint would crowd v7x's 64 MiB VMEM.
    if n >= 1024:
        tn = 1024
    else:
        tn = _round_up(n, 256)
    if n >= 512:
        tm = 512
    elif n >= 256:
        tm = 256
    else:
        tm = _round_up(n, 8)

    def vmem_est(tm_, tn_):
        in_bufs = 2 * (tm_ * d * 2 + d * tn_ * 2 + tm_ * tn_)   # double-buffered bf16/bf16/int8
        temps = 4 * tm_ * tn_ * 4                                # s / contrib f32 temporaries
        scratch = tm_ * 128 * 4 + 2 * 8 * 128 * 4
        return in_bufs + temps + scratch

    while vmem_est(tm, tn) > 48 * 1024 * 1024 and tn > 256:
        tn //= 2
    while vmem_est(tm, tn) > 48 * 1024 * 1024 and tm > 256:
        tm //= 2
    return tm, tn, vmem_est(tm, tn)


def npair_loss_center(embeddings, target, l2_reg=0.02):
    """embeddings: (N, D) float32; target: (N, N) label matrix (nonzero => positive)."""
    embeddings = jnp.asarray(embeddings, jnp.float32)
    target = jnp.asarray(target)
    n, d = embeddings.shape
    assert target.shape == (n, n)

    tm, tn, vmem_est = _pick_tiles(n, d)
    nr = _round_up(n, tm)
    nc = _round_up(n, tn)
    n_row_blocks = nr // tm
    n_col_blocks = nc // tn
    pad_r = nr - n
    pad_c = nc - n

    # Scalar-side terms (fused by XLA with the mask producer / input cast); done in f32
    # on the unpadded arrays so the valid count is exact and L2 keeps full precision.
    n_valid = jnp.sum(jnp.any(target != 0, axis=1).astype(jnp.int32))
    l2_sum = jnp.sum(embeddings * embeddings)

    # bf16 operands for the MXU; zero padding is semantically neutral (zero mask =>
    # no pair contribution, zero rows => no dot contribution).
    emb_bf16 = embeddings.astype(jnp.bfloat16)
    x_lhs = jnp.pad(emb_bf16, ((0, pad_r), (0, 0))) if pad_r else emb_bf16
    x_rhs_t = emb_bf16.T
    if pad_c:
        x_rhs_t = jnp.pad(x_rhs_t, ((0, 0), (0, pad_c)))
    # Single fused producer for the padded int8 mask (no extra N^2 copy round trip).
    if pad_r or pad_c:
        mask_p = jnp.pad(target != 0, ((0, pad_r), (0, pad_c))).astype(jnp.int8)
    else:
        mask_p = (target != 0).astype(jnp.int8)

    cost = pl.CostEstimate(
        flops=2 * nr * nc * d,
        transcendentals=0,
        bytes_accessed=(nr * nc                          # int8 mask stream
                        + nr * d * 2                     # bf16 LHS
                        + n_row_blocks * d * nc * 2      # bf16 RHS re-streamed per row block
                        + n_row_blocks * 8 * 128 * 4),   # lane-dense partial outputs
    )

    # Explicit scoped-VMEM budget: above the v5e 16 MiB default, below v7x's 64 MiB
    # physical VMEM.
    vmem_limit = int(min(64 * 1024 * 1024,
                         max(32 * 1024 * 1024, vmem_est + (4 << 20))))

    pair_out = pl.pallas_call(
        _npair_tile_kernel,
        out_shape=jax.ShapeDtypeStruct((n_row_blocks, 8, 128), jnp.float32),
        grid=(n_row_blocks, n_col_blocks),
        in_specs=[
            pl.BlockSpec((tm, d), lambda i, j: (i, 0)),    # bf16 LHS row block (resident over j)
            pl.BlockSpec((d, tn), lambda i, j: (0, j)),    # bf16 pre-transposed RHS col block
            pl.BlockSpec((tm, tn), lambda i, j: (i, j)),   # int8 positive-mask tile
        ],
        out_specs=pl.BlockSpec((1, 8, 128), lambda i, j: (i, 0, 0)),
        scratch_shapes=[
            pltpu.VMEM((tm, 128), jnp.float32),            # per-row 128-lane running sums
        ],
        compiler_params=pltpu.CompilerParams(
            dimension_semantics=("parallel", "arbitrary"),
            vmem_limit_bytes=vmem_limit),
        cost_estimate=cost,
    )(x_lhs, x_rhs_t, mask_p)

    # Tiny final reduction over per-row-block partials in plain JAX.
    pair_sum = jnp.sum(pair_out[:, 0, 0])

    pair_loss = pair_sum / jnp.maximum(n_valid.astype(jnp.float32), 1.0)
    l2_loss = l2_sum / jnp.float32(n)
    # If there are no valid anchors, the PyTorch module returns 0 (no L2 term).
    return jnp.where(n_valid > 0,
                     pair_loss + jnp.float32(l2_reg) * l2_loss,
                     jnp.float32(0.0))


if __name__ == "__main__":
    key = jax.random.PRNGKey(0)
    k_emb, k_tgt = jax.random.split(key)

    N, D = 8, 32  # small shapes: batch of 8 embeddings, embedding dim 32

    embeddings = jax.random.normal(k_emb, (N, D), dtype=jnp.float32)

    # Deterministic binary (N, N) positive-indicator matrix; zero out one row
    # to exercise the "anchor with no positives" path.
    target = (jax.random.uniform(k_tgt, (N, N)) > 0.6).astype(jnp.float32)
    target = target.at[3, :].set(0.0)

    loss = npair_loss_center(embeddings, target, l2_reg=0.02)
    loss = jax.block_until_ready(loss)

    # Pure-JAX f32 reference (same math as the PyTorch module's target=None path).
    m_ref = (target != 0).astype(jnp.float32)
    s_ref = embeddings @ embeddings.T
    pair_ref = jnp.sum(m_ref * jnp.abs(s_ref - 1.0))
    nv_ref = jnp.sum((jnp.sum(m_ref, axis=1) > 0).astype(jnp.float32))
    ref = jnp.where(
        nv_ref > 0,
        pair_ref / jnp.maximum(nv_ref, 1.0) + 0.02 * jnp.sum(embeddings ** 2) / N,
        0.0)
    # bf16 MXU operands (f32 accumulation) -> loose relative tolerance vs the f32 ref.
    ref_f = float(ref)
    assert abs(float(loss) - ref_f) < 2e-2 * max(1.0, abs(ref_f)) + 1e-3, (float(loss), ref_f)

    print("KERNEL_OK")
</pallas_src>

<mosaic_0001>
module attributes {stable_mosaic.version = 11 : i64} {
  func.func @_npair_tile_kernel(%arg0: i32, %arg1: i32, %arg2: memref<8x32xbf16, #tpu.memory_space<vmem>>, %arg3: memref<32x256xbf16, #tpu.memory_space<vmem>>, %arg4: memref<8x256xi8, #tpu.memory_space<vmem>>, %arg5: memref<1x8x128xf32, #tpu.memory_space<vmem>>, %arg6: memref<8x128xf32, #tpu.memory_space<vmem>>) attributes {dimension_semantics = [#tpu.dimension_semantics<parallel>, #tpu.dimension_semantics<arbitrary>], iteration_bounds = array<i64: 1, 1>, scalar_prefetch = 0 : i64, scratch_operands = 1 : i64, tpu.core_type = #tpu.core_type<tc>, window_params = [{transform_indices = @transform_0, window_bounds = array<i64: 8, 32>}, {transform_indices = @transform_1, window_bounds = array<i64: 32, 256>}, {transform_indices = @transform_2, window_bounds = array<i64: 8, 256>}, {transform_indices = @transform_3, window_bounds = array<i64: 1, 8, 128>}]} {
    %c0_i32 = arith.constant 0 : i32
    %0 = arith.cmpi eq, %arg1, %c0_i32 : i32
    %1 = arith.extui %0 : i1 to i32
    %c0_i32_0 = arith.constant 0 : i32
    %2 = arith.cmpi ne, %1, %c0_i32_0 : i32
    scf.if %2 {
      %cst_13 = arith.constant 0.000000e+00 : f32
      %21 = vector.broadcast %cst_13 : f32 to vector<8x128xf32>
      %c0_14 = arith.constant 0 : index
      %c0_15 = arith.constant 0 : index
      %22 = vector.load %arg6[%c0_14, %c0_15] : memref<8x128xf32, #tpu.memory_space<vmem>>, vector<8x128xf32>
      tpu.vector_store %arg6[%c0_14, %c0_15], %21 {strides = array<i32>} : memref<8x128xf32, #tpu.memory_space<vmem>>, vector<8x128xf32>,
    } else {
    }
    %c0 = arith.constant 0 : index
    %c0_1 = arith.constant 0 : index
    %3 = vector.load %arg2[%c0, %c0_1] : memref<8x32xbf16, #tpu.memory_space<vmem>>, vector<8x32xbf16>
    %c0_2 = arith.constant 0 : index
    %c0_3 = arith.constant 0 : index
    %4 = vector.load %arg3[%c0_2, %c0_3] : memref<32x256xbf16, #tpu.memory_space<vmem>>, vector<32x256xbf16>
    %cst = arith.constant dense<0.000000e+00> : vector<8x256xf32>
    %5 = tpu.matmul %3, %4, %cst {dimension_numbers = #tpu.dot_dimension_numbers<[1], [0], [0], [1], [0, 0, 1, 1], [], []>} : vector<8x32xbf16>, vector<32x256xbf16>, vector<8x256xf32> -> vector<8x256xf32>
    %c0_4 = arith.constant 0 : index
    %c0_5 = arith.constant 0 : index
    %6 = vector.load %arg4[%c0_4, %c0_5] : memref<8x256xi8, #tpu.memory_space<vmem>>, vector<8x256xi8>
    %7 = arith.sitofp %6 : vector<8x256xi8> to vector<8x256xf32>
    %cst_6 = arith.constant 1.000000e+00 : f32
    %8 = vector.broadcast %cst_6 : f32 to vector<8x256xf32>
    %9 = arith.subf %5, %8 : vector<8x256xf32>
    %10 = math.absf %9 : vector<8x256xf32>
    %11 = arith.mulf %7, %10 : vector<8x256xf32>
    %12 = vector.extract_strided_slice %11 {offsets = [0, 0], sizes = [8, 128], strides = [1, 1]} : vector<8x256xf32> to vector<8x128xf32>
    %13 = vector.extract_strided_slice %11 {offsets = [0, 128], sizes = [8, 128], strides = [1, 1]} : vector<8x256xf32> to vector<8x128xf32>
    %14 = arith.addf %12, %13 : vector<8x128xf32>
    %c0_7 = arith.constant 0 : index
    %c0_8 = arith.constant 0 : index
    %15 = vector.load %arg6[%c0_7, %c0_8] : memref<8x128xf32, #tpu.memory_space<vmem>>, vector<8x128xf32>
    %16 = arith.addf %15, %14 : vector<8x128xf32>
    %c0_9 = arith.constant 0 : index
    %c0_10 = arith.constant 0 : index
    %17 = vector.load %arg6[%c0_9, %c0_10] : memref<8x128xf32, #tpu.memory_space<vmem>>, vector<8x128xf32>
    tpu.vector_store %arg6[%c0_9, %c0_10], %16 {strides = array<i32>} : memref<8x128xf32, #tpu.memory_space<vmem>>, vector<8x128xf32>,
    %c0_i32_11 = arith.constant 0 : i32
    %18 = arith.cmpi eq, %arg1, %c0_i32_11 : i32
    %19 = arith.extui %18 : i1 to i32
    %c0_i32_12 = arith.constant 0 : i32
    %20 = arith.cmpi ne, %19, %c0_i32_12 : i32
    scf.if %20 {
      %c0_13 = arith.constant 0 : index
      %c0_14 = arith.constant 0 : index
      %21 = vector.load %arg6[%c0_13, %c0_14] : memref<8x128xf32, #tpu.memory_space<vmem>>, vector<8x128xf32>
      %22 = vector.shape_cast %21 : vector<8x128xf32> to vector<1x8x128xf32>
      %cst_15 = arith.constant dense<0.000000e+00> : vector<1xf32>
      %23 = vector.multi_reduction <add>, %22, %cst_15 [1, 2] : vector<1x8x128xf32> to vector<1xf32>
      %24 = vector.shape_cast %23 : vector<1xf32> to vector<1x1x1xf32>
      %25 = vector.extract %24[0, 0, 0] : f32 from vector<1x1x1xf32>
      %26 = vector.broadcast %25 : f32 to vector<1x8x128xf32>
      %c0_16 = arith.constant 0 : index
      %c0_17 = arith.constant 0 : index
      %c0_18 = arith.constant 0 : index
      %27 = vector.load %arg5[%c0_16, %c0_17, %c0_18] : memref<1x8x128xf32, #tpu.memory_space<vmem>>, vector<1x8x128xf32>
      tpu.vector_store %arg5[%c0_16, %c0_17, %c0_18], %26 {strides = array<i32>} : memref<1x8x128xf32, #tpu.memory_space<vmem>>, vector<1x8x128xf32>,
    } else {
    }
    return
  }
  func.func @transform_0(%arg0: i32, %arg1: i32) -> (i32, i32) {
    %c0_i32 = arith.constant 0 : i32
    %c0_i32_0 = arith.constant 0 : i32
    return %arg0, %c0_i32 : i32, i32
  }
  func.func @transform_1(%arg0: i32, %arg1: i32) -> (i32, i32) {
    %c0_i32 = arith.constant 0 : i32
    %c0_i32_0 = arith.constant 0 : i32
    return %c0_i32, %arg1 : i32, i32
  }
  func.func @transform_2(%arg0: i32, %arg1: i32) -> (i32, i32) {
    %c0_i32 = arith.constant 0 : i32
    return %arg0, %arg1 : i32, i32
  }
  func.func @transform_3(%arg0: i32, %arg1: i32) -> (i32, i32, i32) {
    %c0_i32 = arith.constant 0 : i32
    %c0_i32_0 = arith.constant 0 : i32
    %c0_i32_1 = arith.constant 0 : i32
    return %arg0, %c0_i32, %c0_i32_0 : i32, i32, i32
  }
}

</mosaic_0001>

<llo_original>
// kernel: tpu_custom_call.1
$region0: #{tpu_custom_call.1}
  #allocation0 [shape = 'u32[]', space=smem, size = 0x4, offset = 0x4, fixed_abs, tag = 'smem constant byte address 0x4 - core index']
  #allocation1 [shape = 'u32[72,128]{1,0:T(1,128)}', space=vmem, size = 0x9000, scoped, tag = 'internal scratch']
  #allocation2 [shape = 'f32[8,128]{1,0:T(8,128)}', space=vmem, size = 0x1000, scoped, tag = 'scratch operand']
  %s0 = inlined_call_operand.hbm [shape: bf16[8,32], index: 0, kind: input, shape index: {}]
  %s1 = inlined_call_operand.hbm [shape: bf16[32,256], index: 1, kind: input, shape index: {}]
  %s2 = inlined_call_operand.hbm [shape: s8[8,256], index: 2, kind: input, shape index: {}]
  %s3 = inlined_call_operand.hbm [shape: f32[1,8,128], index: 3, kind: output, shape index: {}]
  %s4 = sld [smem:[#allocation0]]
  $region42: #{tpu_custom_call.1} parent=0
    _
  %s6 = ssub.s32 1, %s4
  %s7 = scalar_select 0, %s6, %s4
  $region1: #{tpu_custom_call.1} parent=0
    #allocation3 [shape = 'u8[2048]{0}', space=vmem, size = 0x800, scoped, tag = 'input window, operand 0, single buffered']
    #allocation4 [shape = 's32[1]{0}', space=sflag, size = 0x4, scoped, tag = 'scoped memory for tpu_custom_call.1']
    #allocation5 [shape = 's32[1]{0}', space=sflag, size = 0x4, scoped, tag = 'scoped memory for tpu_custom_call.1']
    #allocation6 [shape = 'u8[16384]{0}', space=vmem, size = 0x4000, scoped, tag = 'input window, operand 1, single buffered']
    #allocation7 [shape = 's32[1]{0}', space=sflag, size = 0x4, scoped, tag = 'scoped memory for tpu_custom_call.1']
    #allocation8 [shape = 'u8[2048]{0}', space=vmem, size = 0x800, scoped, tag = 'input window, operand 2, single buffered']
    #allocation9 [shape = 'u8[4096]{0}', space=vmem, size = 0x1000, scoped, tag = 'output window, operand 0, single buffered']
    %8 = vsyncpa [#allocation4], 0
    %9 = vsyncpa [#allocation7], 0
    %10 = vsyncpa [#allocation5], 0
    // Predicated region
    $region2: #{tpu_custom_call.1} parent=1 // pred_check
      _
    $region3: #{tpu_custom_call.1} parent=1 // pred_check_branch
      %12 = sbr.rel (0) target = $region5
    $region4: #{tpu_custom_call.1} parent=1 // pred_region
      %14 = vsyncadd [#allocation4], 0
      %s16 = sshll.u32 %s0, 4
      %s17 = int_to_ptr.hbm [resolvable:$true] %s16
      %s18 = sshll.u32 [#allocation3], 4
      %s19 = int_to_ptr.vmem [resolvable:$true] %s18
      %21 = dma.hbm_to_vmem [thread:$0]  %s17, 64, %s19, [#allocation4]
    $region5: #{tpu_custom_call.1} parent=1 // pred_fallthru
      _
    // Predicated region
    $region6: #{tpu_custom_call.1} parent=1 // pred_check
      _
    $region7: #{tpu_custom_call.1} parent=1 // pred_check_branch
      %23 = sbr.rel (0) target = $region9
    $region8: #{tpu_custom_call.1} parent=1 // pred_region
      %25 = vsyncadd [#allocation7], 0
      %s26 = sshll.u32 %s1, 4
      %s27 = int_to_ptr.hbm [resolvable:$true] %s26
      %s28 = sshll.u32 [#allocation6], 4
      %s29 = int_to_ptr.vmem [resolvable:$true] %s28
      %34 = dma.hbm_to_vmem [thread:$0]  %s27, 512, %s29, [#allocation7], 128, 128, 8
    $region9: #{tpu_custom_call.1} parent=1 // pred_fallthru
      _
    // Predicated region
    $region10: #{tpu_custom_call.1} parent=1 // pred_check
      _
    $region11: #{tpu_custom_call.1} parent=1 // pred_check_branch
      %36 = sbr.rel (0) target = $region13
    $region12: #{tpu_custom_call.1} parent=1 // pred_region
      %38 = vsyncadd [#allocation7], 0
      %s40 = sshll.u32 %s2, 4
      %s41 = int_to_ptr.hbm [resolvable:$true] %s40
      %s42 = sshll.u32 [#allocation8], 4
      %s43 = int_to_ptr.vmem [resolvable:$true] %s42
      %45 = dma.hbm_to_vmem [thread:$0]  %s41, 64, %s43, [#allocation7]
    $region13: #{tpu_custom_call.1} parent=1 // pred_fallthru
      _
    // Predicated region
    $region14: #{tpu_custom_call.1} parent=1 // pred_check
      _
    $region15: #{tpu_custom_call.1} parent=1 // pred_check_branch
      %47 = sbr.rel (0) target = $region17
    $region16: #{tpu_custom_call.1} parent=1 // pred_region
      %49 = dma.done [#allocation4], 64
    $region17: #{tpu_custom_call.1} parent=1 // pred_fallthru
      _
    // Predicated region
    $region18: #{tpu_custom_call.1} parent=1 // pred_check
      _
    $region19: #{tpu_custom_call.1} parent=1 // pred_check_branch
      %51 = sbr.rel (0) target = $region21
    $region20: #{tpu_custom_call.1} parent=1 // pred_region
      %53 = dma.done [#allocation7], 512
    $region21: #{tpu_custom_call.1} parent=1 // pred_fallthru
      _
    // Predicated region
    $region22: #{tpu_custom_call.1} parent=1 // pred_check
      _
    $region23: #{tpu_custom_call.1} parent=1 // pred_check_branch
      %55 = sbr.rel (0) target = $region25
    $region24: #{tpu_custom_call.1} parent=1 // pred_region
      %57 = dma.done [#allocation7], 64
    $region25: #{tpu_custom_call.1} parent=1 // pred_fallthru
      _
    %p59 = scmp.eq.s32.totalorder 0, 0
    // Predicated region
    $region26: #{tpu_custom_call.1} parent=1 // pred_check
      %p60 = pneg %p59
    $region27: #{tpu_custom_call.1} parent=1 // pred_check_branch
      %62 = sbr.rel (%p60) target = $region29
    $region28: #{tpu_custom_call.1} parent=1 // pred_region
      %63 = vst [vmem:[#allocation2] sm:$0xff] 0.0
    $region29: #{tpu_custom_call.1} parent=1 // pred_fallthru
      _
    %v64 = vld [vmem:[#allocation3] sm:$0xf]
    %v65 = vld [vmem:[#allocation6] sm:$0xff]
    %v66 = vld [vmem:[#allocation6 + $0x8] sm:$0xff]
    %v67 = vld [vmem:[#allocation6 + $0x10] sm:$0xff]
    %v68 = vld [vmem:[#allocation6 + $0x18] sm:$0xff]
    %v73 = vunpack.c.l.b16 %v65
    %v74 = vunpack.c.h.b16 %v65
    %v75 = vunpack.c.l.b16 %v66
    %v76 = vunpack.c.h.b16 %v66
    %v77 = vunpack.c.l.b16 %v67
    %v78 = vunpack.c.h.b16 %v67
    %v79 = vunpack.c.l.b16 %v68
    %v80 = vunpack.c.h.b16 %v68
    %v81 = vpack.c.b16 %v75, %v73
    %v82 = vpack.c.b16 %v76, %v74
    %v83 = vpack.c.b16 %v79, %v77
    %v84 = vpack.c.b16 %v80, %v78
    %vm89 = vcmask 261120
    %v91 = vsel %vm89, %v64, 0
    %93 = vmatpush.bf16.msra.mxu0 0
    %94 = vmatpush.bf16.msra.mxu0 0
    %95 = vmatpush.bf16.msra.mxu0 0
    %96 = vmatpush.bf16.msra.mxu0 0
    %97 = vmatpush.bf16.msra.mxu0 0
    %98 = vmatpush.bf16.msra.mxu0 0
    %99 = vmatpush.bf16.msra.mxu0 %v83
    %100 = vmatpush.bf16.msra.mxu0 %v81
    %101 = vmatmul.bf16.gmra.mxu0 %v91
    %v102 = vpop.f32.mrf.mxu0
    %v103 = vadd.f32 0.0, %v102
    %v104 = vpop.f32.mrf.mxu0
    %105 = vdwg.mxu0
    %106 = vmatpush.bf16.msra.mxu0 0
    %107 = vmatpush.bf16.msra.mxu0 0
    %108 = vmatpush.bf16.msra.mxu0 0
    %109 = vmatpush.bf16.msra.mxu0 0
    %110 = vmatpush.bf16.msra.mxu0 0
    %111 = vmatpush.bf16.msra.mxu0 0
    %112 = vmatpush.bf16.msra.mxu0 %v84
    %113 = vmatpush.bf16.msra.mxu0 %v82
    %114 = vmatmul.bf16.gmra.mxu0 %v91
    %v115 = vpop.f32.mrf.mxu0
    %v116 = vadd.f32 0.0, %v115
    %v117 = vpop.f32.mrf.mxu0
    %118 = vdwg.mxu0
    %v119 = vld [vmem:[#allocation8] sm:$0xf]
    %v120 = vunpack.c.0.s8 %v119
    %v121 = vunpack.c.1.s8 %v119
    %v122 = vcvt.s32.f32 %v120
    %v123 = vcvt.s32.f32 %v121
    %v124 = vsub.f32 %v103, 1.0
    %v125 = vsub.f32 %v116, 1.0
    %v126 = vand.u32 2147483647, %v124
    %v127 = vand.u32 2147483647, %v125
    %v128 = vmul.f32 %v122, %v126
    %v129 = vmul.f32 %v123, %v127
    %v130 = vadd.f32 %v128, %v129
    %v131 = vld [vmem:[#allocation2] sm:$0xff]
    %v132 = vadd.f32 %v131, %v130
    %133 = vst [vmem:[#allocation2] sm:$0xff] %v132
    // Predicated region
    $region30: #{tpu_custom_call.1} parent=1 // pred_check
      %p134 = pneg %p59
    $region31: #{tpu_custom_call.1} parent=1 // pred_check_branch
      %136 = sbr.rel (%p134) target = $region33
    $region32: #{tpu_custom_call.1} parent=1 // pred_region
      %v137 = vld [vmem:[#allocation2] sm:$0xff]
      %138 = vadd.xlane.f32.xlu0 %v137
      %v139 = vpop.xlane.xlu0 %138
      %v140 = vrot.slane %v139, 4
      %v141 = vadd.f32 %v139, %v140
      %v142 = vrot.slane %v141, 2
      %v143 = vadd.f32 %v141, %v142
      %v144 = vrot.slane %v143, 1
      %v145 = vadd.f32 %v143, %v144
      %s146 = vtos %v145
      %v147 = vstv %s146
      %148 = vst [vmem:[#allocation9] sm:$0xff] %v147
    $region33: #{tpu_custom_call.1} parent=1 // pred_fallthru
      _
    // Predicated region
    $region34: #{tpu_custom_call.1} parent=1 // pred_check
      _
    $region35: #{tpu_custom_call.1} parent=1 // pred_check_branch
      %150 = sbr.rel (0) target = $region37
    $region36: #{tpu_custom_call.1} parent=1 // pred_region
      %152 = vsyncadd [#allocation5], 0
      %s154 = sshll.u32 [#allocation9], 4
      %s155 = int_to_ptr.vmem [resolvable:$true] %s154
      %s156 = sshll.u32 %s3, 4
      %s157 = int_to_ptr.hbm [resolvable:$true] %s156
      %159 = dma.vmem_to_hbm [thread:$0]  %s155, 128, %s157, [#allocation5]
    $region37: #{tpu_custom_call.1} parent=1 // pred_fallthru
      _
    // Predicated region
    $region38: #{tpu_custom_call.1} parent=1 // pred_check
      _
    $region39: #{tpu_custom_call.1} parent=1 // pred_check_branch
      %161 = sbr.rel (0) target = $region41
    $region40: #{tpu_custom_call.1} parent=1 // pred_region
      %163 = dma.done [#allocation5], 128
    $region41: #{tpu_custom_call.1} parent=1 // pred_fallthru
      _
    %164 = vsyncpa [#allocation4], 1
    %165 = vsyncpa [#allocation7], 1
    %166 = vsyncpa [#allocation5], 1

</llo_original>
